<compile_context>
chip_gen: v5e
topology: v5e:2x2
jax: 0.10.0
libtpu: 0.0.40
codegen_flags: <defaults>
</compile_context>

<pallas_src>
import functools

import jax
import jax.numpy as jnp
from jax.experimental import pallas as pl
from jax.experimental.pallas import tpu as pltpu


def _ce_partial_kernel(x_ref, d_ref, out_ref, *, n_rows, tile_n):
    # x_ref:  (TILE_N, C) logits in VMEM, native dtype (DMA stays narrow)
    # d_ref:  (TILE_N, 1) int32 labels in VMEM
    # out_ref: (8, 128) f32 per-tile partial-sum block in VMEM
    i = pl.program_id(0)

    x = x_ref[...]                                   # (TILE_N, C), native dtype
    labels = d_ref[...]                              # (TILE_N, 1), int32

    # Row-validity mask for the ragged last tile (padded rows hold garbage).
    row = jax.lax.broadcasted_iota(jnp.int32, (tile_n, 1), 0) + i * tile_n
    valid = row < n_rows                             # (TILE_N, 1) bool

    # Numerically-stable log-sum-exp per row (f32 math inside the tile only).
    xf = x.astype(jnp.float32)
    m = jnp.max(xf, axis=-1, keepdims=True)                      # (TILE_N, 1)
    sumexp = jnp.sum(jnp.exp(xf - m), axis=-1, keepdims=True)    # (TILE_N, 1)
    lse = jnp.log(sumexp) + m                                    # (TILE_N, 1)

    # Target-logit gather fused as masked select + row sum (no one-hot temp).
    col = jax.lax.broadcasted_iota(jnp.int32, xf.shape, 1)       # (TILE_N, C)
    tgt = jnp.sum(jnp.where(col == labels, xf, 0.0), axis=-1, keepdims=True)

    per_row = jnp.where(valid, lse - tgt, 0.0)                   # (TILE_N, 1)
    partial = jnp.sum(per_row)                                   # scalar

    # Lane-dense write of this tile's partial sum; final tiny reduction and
    # divide-by-N happen in the wrapper so the grid axis can stay "parallel".
    out_ref[...] = jnp.full((8, 128), partial, dtype=jnp.float32)


def _choose_tile_n(n, c, itemsize):
    # ~4 MiB of logits per tile: double-buffered this stays well under the
    # 32 MiB scoped-VMEM default on v7x; v5e/v6e (128 MiB) have ample headroom.
    target_bytes = 4 * 1024 * 1024
    t = min(n, max(8, target_bytes // max(1, c * itemsize)))
    t = max(8, (t // 8) * 8)              # keep sublane multiple of 8
    return int(t)


@functools.partial(jax.jit, static_argnames=("tile_n",))
def cross_entropy_pallas(x, d, tile_n=None):
    """nn.CrossEntropyLoss()(x, d) (mean reduction) via a Pallas TPU kernel.

    x: (N, C) float logits; d: (N,) integer class indices in [0, C).
    """
    n, c = x.shape
    itemsize = jnp.dtype(x.dtype).itemsize
    if tile_n is None:
        tile_n = _choose_tile_n(n, c, itemsize)
    grid = pl.cdiv(n, tile_n)

    d2 = d.astype(jnp.int32).reshape(n, 1)

    kernel = functools.partial(_ce_partial_kernel, n_rows=n, tile_n=tile_n)

    partials = pl.pallas_call(
        kernel,
        out_shape=jax.ShapeDtypeStruct((grid * 8, 128), jnp.float32),
        grid=(grid,),
        in_specs=[
            pl.BlockSpec((tile_n, c), lambda i: (i, 0)),   # logits (native dtype)
            pl.BlockSpec((tile_n, 1), lambda i: (i, 0)),   # labels
        ],
        out_specs=pl.BlockSpec((8, 128), lambda i: (i, 0)),
        compiler_params=pltpu.CompilerParams(
            dimension_semantics=("parallel",),
        ),
        cost_estimate=pl.CostEstimate(
            flops=5 * n * c,
            transcendentals=n * c,
            bytes_accessed=n * c * itemsize + n * 4 + grid * 8 * 128 * 4,
        ),
    )(x, d2)

    # Tiny final reduction (one f32 per tile) + mean normalization.
    return jnp.sum(partials[::8, 0]) / jnp.float32(n)


class Loss:
    """Mirror of the PyTorch module: forward evaluates CE but returns None."""

    def forward(self, x, d):
        # NOTE: PyTorch's CrossEntropyLoss default ignore_index=-100 is not
        # replicated; labels are assumed to be valid class indices (as in the
        # original model's usage). The unused nn.L1Loss member needs no kernel.
        self.last_loss = cross_entropy_pallas(x, d)
        # The PyTorch forward has no `return`, so it returns None.
        return None


if __name__ == "__main__":
    key = jax.random.PRNGKey(0)
    kx, kd = jax.random.split(key)

    # Small logit batch; N deliberately NOT a multiple of the explicit tile
    # below so the ragged-tile masking path is exercised too.
    N, C = 72, 32
    x = jax.random.normal(kx, (N, C), dtype=jnp.float32)
    d = jax.random.randint(kd, (N,), 0, C, dtype=jnp.int32)

    # Module-style usage (forward computes CE, returns None like the spec).
    m = Loss()
    assert m.forward(x, d) is None
    loss = jax.block_until_ready(m.last_loss)

    # Multi-tile path: grid of 5 with a ragged last tile (72 = 4*16 + 8).
    loss_tiled = jax.block_until_ready(cross_entropy_pallas(x, d, tile_n=16))

    # Pure-JAX reference (mean-reduced softmax cross entropy).
    ref = jnp.mean(
        jax.nn.logsumexp(x, axis=-1)
        - jnp.take_along_axis(x, d[:, None], axis=-1)[:, 0]
    )
    assert jnp.allclose(loss, ref, atol=1e-5, rtol=1e-5), (loss, ref)
    assert jnp.allclose(loss_tiled, ref, atol=1e-5, rtol=1e-5), (loss_tiled, ref)

    print("KERNEL_OK")
</pallas_src>

<mosaic_0001>
module attributes {stable_mosaic.version = 11 : i64} {
  func.func @_ce_partial_kernel(%arg0: i32, %arg1: memref<72x32xf32, #tpu.memory_space<vmem>>, %arg2: memref<72x1xi32, #tpu.memory_space<vmem>>, %arg3: memref<8x128xf32, #tpu.memory_space<vmem>>) attributes {dimension_semantics = [#tpu.dimension_semantics<parallel>], iteration_bounds = array<i64: 1>, scalar_prefetch = 0 : i64, scratch_operands = 0 : i64, tpu.core_type = #tpu.core_type<tc>, window_params = [{transform_indices = @transform_0, window_bounds = array<i64: 72, 32>}, {transform_indices = @transform_1, window_bounds = array<i64: 72, 1>}, {transform_indices = @transform_2, window_bounds = array<i64: 8, 128>}]} {
    %c0 = arith.constant 0 : index
    %c0_0 = arith.constant 0 : index
    %0 = vector.load %arg1[%c0, %c0_0] : memref<72x32xf32, #tpu.memory_space<vmem>>, vector<72x32xf32>
    %c0_1 = arith.constant 0 : index
    %c0_2 = arith.constant 0 : index
    %1 = vector.load %arg2[%c0_1, %c0_2] : memref<72x1xi32, #tpu.memory_space<vmem>>, vector<72x1xi32>
    %2 = tpu.iota {dimensions = array<i32: 0>} : vector<72x1xi32>
    %c72_i32 = arith.constant 72 : i32
    %3 = arith.muli %arg0, %c72_i32 : i32
    %4 = vector.broadcast %3 : i32 to vector<72x1xi32>
    %5 = arith.addi %2, %4 : vector<72x1xi32>
    %c72_i32_3 = arith.constant 72 : i32
    %6 = vector.broadcast %c72_i32_3 : i32 to vector<72x1xi32>
    %7 = arith.cmpi slt, %5, %6 : vector<72x1xi32>
    %cst = arith.constant dense<0xFF800000> : vector<72xf32>
    %8 = vector.multi_reduction <maximumf>, %0, %cst [1] : vector<72x32xf32> to vector<72xf32>
    %9 = vector.shape_cast %8 : vector<72xf32> to vector<72x1xf32>
    %10 = vector.broadcast %9 : vector<72x1xf32> to vector<72x32xf32>
    %11 = arith.subf %0, %10 : vector<72x32xf32>
    %12 = math.exp %11 : vector<72x32xf32>
    %cst_4 = arith.constant dense<0.000000e+00> : vector<72xf32>
    %13 = vector.multi_reduction <add>, %12, %cst_4 [1] : vector<72x32xf32> to vector<72xf32>
    %14 = vector.shape_cast %13 : vector<72xf32> to vector<72x1xf32>
    %15 = math.log %14 : vector<72x1xf32>
    %16 = arith.addf %15, %9 : vector<72x1xf32>
    %17 = tpu.iota {dimensions = array<i32: 1>} : vector<72x32xi32>
    %18 = vector.broadcast %1 : vector<72x1xi32> to vector<72x32xi32>
    %19 = arith.cmpi eq, %17, %18 : vector<72x32xi32>
    %cst_5 = arith.constant 0.000000e+00 : f32
    %20 = vector.broadcast %cst_5 : f32 to vector<72x32xf32>
    %21 = arith.select %19, %0, %20 : vector<72x32xi1>, vector<72x32xf32>
    %cst_6 = arith.constant dense<0.000000e+00> : vector<72xf32>
    %22 = vector.multi_reduction <add>, %21, %cst_6 [1] : vector<72x32xf32> to vector<72xf32>
    %23 = vector.shape_cast %22 : vector<72xf32> to vector<72x1xf32>
    %24 = arith.subf %16, %23 : vector<72x1xf32>
    %cst_7 = arith.constant 0.000000e+00 : f32
    %25 = vector.broadcast %cst_7 : f32 to vector<72x1xf32>
    %26 = arith.select %7, %24, %25 : vector<72x1xi1>, vector<72x1xf32>
    %27 = vector.shape_cast %26 : vector<72x1xf32> to vector<1x72x1xf32>
    %cst_8 = arith.constant dense<0.000000e+00> : vector<1xf32>
    %28 = vector.multi_reduction <add>, %27, %cst_8 [1, 2] : vector<1x72x1xf32> to vector<1xf32>
    %29 = vector.shape_cast %28 : vector<1xf32> to vector<1x1x1xf32>
    %30 = vector.extract %29[0, 0, 0] : f32 from vector<1x1x1xf32>
    %31 = vector.broadcast %30 : f32 to vector<8x128xf32>
    %c0_9 = arith.constant 0 : index
    %c0_10 = arith.constant 0 : index
    %32 = vector.load %arg3[%c0_9, %c0_10] : memref<8x128xf32, #tpu.memory_space<vmem>>, vector<8x128xf32>
    tpu.vector_store %arg3[%c0_9, %c0_10], %31 {strides = array<i32>} : memref<8x128xf32, #tpu.memory_space<vmem>>, vector<8x128xf32>,
    return
  }
  func.func @transform_0(%arg0: i32) -> (i32, i32) {
    %c0_i32 = arith.constant 0 : i32
    %c0_i32_0 = arith.constant 0 : i32
    return %arg0, %c0_i32 : i32, i32
  }
  func.func @transform_1(%arg0: i32) -> (i32, i32) {
    %c0_i32 = arith.constant 0 : i32
    %c0_i32_0 = arith.constant 0 : i32
    return %arg0, %c0_i32 : i32, i32
  }
  func.func @transform_2(%arg0: i32) -> (i32, i32) {
    %c0_i32 = arith.constant 0 : i32
    %c0_i32_0 = arith.constant 0 : i32
    return %arg0, %c0_i32 : i32, i32
  }
}

</mosaic_0001>

<llo_original>
// kernel: cross_entropy_pallas.1
$region0: #{cross_entropy_pallas.1}
  #allocation0 [shape = 'u32[]', space=smem, size = 0x4, offset = 0x4, fixed_abs, tag = 'smem constant byte address 0x4 - core index']
  #allocation1 [shape = 'u32[72,128]{1,0:T(1,128)}', space=vmem, size = 0x9000, scoped, tag = 'internal scratch']
  %s0 = inlined_call_operand.vmem [shape: f32[72,32], index: 0, kind: input, shape index: {}]
  %s1 = inlined_call_operand.vmem [shape: s32[72,1], index: 1, kind: input, shape index: {}]
  %s2 = inlined_call_operand.vmem [shape: f32[8,128], index: 2, kind: output, shape index: {}]
  %s3 = sld [smem:[#allocation0]]
  $region18: #{cross_entropy_pallas.1} parent=0
    _
  %s5 = ssub.s32 1, %s3
  %s6 = scalar_select 0, %s5, %s3
  // Predicated region
  $region2: #{cross_entropy_pallas.1} parent=0 // pred_check
    _
  $region3: #{cross_entropy_pallas.1} parent=0 // pred_check_branch
    %8 = sbr.rel (0) target = $region5
  $region4: #{cross_entropy_pallas.1} parent=0 // pred_region
    _
  $region5: #{cross_entropy_pallas.1} parent=0 // pred_fallthru
    _
  // Predicated region
  $region6: #{cross_entropy_pallas.1} parent=0 // pred_check
    _
  $region7: #{cross_entropy_pallas.1} parent=0 // pred_check_branch
    %10 = sbr.rel (0) target = $region9
  $region8: #{cross_entropy_pallas.1} parent=0 // pred_region
    _
  $region9: #{cross_entropy_pallas.1} parent=0 // pred_fallthru
    _
  %v11 = vld [vmem:[%s0] sm:$0xff]
  %v12 = vld [vmem:[%s0 + $0x8] sm:$0xff]
  %v13 = vld [vmem:[%s0 + $0x10] sm:$0xff]
  %v14 = vld [vmem:[%s0 + $0x18] sm:$0xff]
  %v15 = vld [vmem:[%s0 + $0x20] sm:$0xff]
  %v16 = vld [vmem:[%s0 + $0x28] sm:$0xff]
  %v17 = vld [vmem:[%s0 + $0x30] sm:$0xff]
  %v18 = vld [vmem:[%s0 + $0x38] sm:$0xff]
  %v19 = vld [vmem:[%s0 + $0x40] sm:$0xff]
  %v20 = vld [vmem:[%s1] sm:$0xff]
  %v21 = vld [vmem:[%s1 + $0x8] sm:$0xff]
  %v22 = vld [vmem:[%s1 + $0x10] sm:$0xff]
  %v23 = vld [vmem:[%s1 + $0x18] sm:$0xff]
  %v24 = vld [vmem:[%s1 + $0x20] sm:$0xff]
  %v25 = vld [vmem:[%s1 + $0x28] sm:$0xff]
  %v26 = vld [vmem:[%s1 + $0x30] sm:$0xff]
  %v27 = vld [vmem:[%s1 + $0x38] sm:$0xff]
  %v28 = vld [vmem:[%s1 + $0x40] sm:$0xff]
  %v29 = vlaneseq
  %v30 = vshrl.u32 %v29, 7
  %v31 = vadd.s32 %v30, 8
  %v32 = vadd.s32 %v30, 16
  %v33 = vadd.s32 %v30, 24
  %v34 = vadd.s32 %v30, 32
  %v35 = vadd.s32 %v30, 40
  %v36 = vadd.s32 %v30, 48
  %v37 = vadd.s32 %v30, 56
  %v38 = vadd.s32 %v30, 64
  %s39 = smul.u32 0, 72
  %v40 = vstv %s39
  %v41 = vadd.s32 %v30, %v40
  %v42 = vadd.s32 %v31, %v40
  %v43 = vadd.s32 %v32, %v40
  %v44 = vadd.s32 %v33, %v40
  %v45 = vadd.s32 %v34, %v40
  %v46 = vadd.s32 %v35, %v40
  %v47 = vadd.s32 %v36, %v40
  %v48 = vadd.s32 %v37, %v40
  %v49 = vadd.s32 %v38, %v40
  %vm50 = vcmp.lt.s32.totalorder %v41, 72
  %vm51 = vcmp.lt.s32.totalorder %v42, 72
  %vm52 = vcmp.lt.s32.totalorder %v43, 72
  %vm53 = vcmp.lt.s32.totalorder %v44, 72
  %vm54 = vcmp.lt.s32.totalorder %v45, 72
  %vm55 = vcmp.lt.s32.totalorder %v46, 72
  %vm56 = vcmp.lt.s32.totalorder %v47, 72
  %vm57 = vcmp.lt.s32.totalorder %v48, 72
  %vm58 = vcmp.lt.s32.totalorder %v49, 72
  %vm59 = vcmask 261120
  %v60 = vsel %vm59, %v11, -inf
  %61 = vmax.xlane.f32.xlu0 %v60
  %v62 = vpop.xlane.xlu0 %61
  %v63 = vsel %vm59, %v12, -inf
  %64 = vmax.xlane.f32.xlu0 %v63
  %v65 = vpop.xlane.xlu0 %64
  %v66 = vsel %vm59, %v13, -inf
  %67 = vmax.xlane.f32.xlu0 %v66
  %v68 = vpop.xlane.xlu0 %67
  %v69 = vsel %vm59, %v14, -inf
  %70 = vmax.xlane.f32.xlu0 %v69
  %v71 = vpop.xlane.xlu0 %70
  %v72 = vsel %vm59, %v15, -inf
  %73 = vmax.xlane.f32.xlu0 %v72
  %v74 = vpop.xlane.xlu0 %73
  %v75 = vsel %vm59, %v16, -inf
  %76 = vmax.xlane.f32.xlu0 %v75
  %v77 = vpop.xlane.xlu0 %76
  %v78 = vsel %vm59, %v17, -inf
  %79 = vmax.xlane.f32.xlu0 %v78
  %v80 = vpop.xlane.xlu0 %79
  %v81 = vsel %vm59, %v18, -inf
  %82 = vmax.xlane.f32.xlu0 %v81
  %v83 = vpop.xlane.xlu0 %82
  %v84 = vsel %vm59, %v19, -inf
  %85 = vmax.xlane.f32.xlu0 %v84
  %v86 = vpop.xlane.xlu0 %85
  %v87 = vsub.f32 %v11, %v62
  %v88 = vsub.f32 %v12, %v65
  %v89 = vsub.f32 %v13, %v68
  %v90 = vsub.f32 %v14, %v71
  %v91 = vsub.f32 %v15, %v74
  %v92 = vsub.f32 %v16, %v77
  %v93 = vsub.f32 %v17, %v80
  %v94 = vsub.f32 %v18, %v83
  %v95 = vsub.f32 %v19, %v86
  %v96 = vmul.f32 %v87, 1.442695
  %v97 = vpow.pop %v96
  %v98 = vmul.f32 %v88, 1.442695
  %v99 = vpow.pop %v98
  %v100 = vmul.f32 %v89, 1.442695
  %v101 = vpow.pop %v100
  %v102 = vmul.f32 %v90, 1.442695
  %v103 = vpow.pop %v102
  %v104 = vmul.f32 %v91, 1.442695
  %v105 = vpow.pop %v104
  %v106 = vmul.f32 %v92, 1.442695
  %v107 = vpow.pop %v106
  %v108 = vmul.f32 %v93, 1.442695
  %v109 = vpow.pop %v108
  %v110 = vmul.f32 %v94, 1.442695
  %v111 = vpow.pop %v110
  %v112 = vmul.f32 %v95, 1.442695
  %v113 = vpow.pop %v112
  %v114 = vsel %vm59, %v97, 0.0
  %115 = vadd.xlane.f32.xlu0 %v114
  %v116 = vpop.xlane.xlu0 %115
  %v117 = vsel %vm59, %v99, 0.0
  %118 = vadd.xlane.f32.xlu0 %v117
  %v119 = vpop.xlane.xlu0 %118
  %v120 = vsel %vm59, %v101, 0.0
  %121 = vadd.xlane.f32.xlu0 %v120
  %v122 = vpop.xlane.xlu0 %121
  %v123 = vsel %vm59, %v103, 0.0
  %124 = vadd.xlane.f32.xlu0 %v123
  %v125 = vpop.xlane.xlu0 %124
  %v126 = vsel %vm59, %v105, 0.0
  %127 = vadd.xlane.f32.xlu0 %v126
  %v128 = vpop.xlane.xlu0 %127
  %v129 = vsel %vm59, %v107, 0.0
  %130 = vadd.xlane.f32.xlu0 %v129
  %v131 = vpop.xlane.xlu0 %130
  %v132 = vsel %vm59, %v109, 0.0
  %133 = vadd.xlane.f32.xlu0 %v132
  %v134 = vpop.xlane.xlu0 %133
  %v135 = vsel %vm59, %v111, 0.0
  %136 = vadd.xlane.f32.xlu0 %v135
  %v137 = vpop.xlane.xlu0 %136
  %v138 = vsel %vm59, %v113, 0.0
  %139 = vadd.xlane.f32.xlu0 %v138
  %v140 = vpop.xlane.xlu0 %139
  %v141 = vlog2.pop %v116
  %v142 = vmul.f32 %v141, 0.6931472
  %v143 = vlog2.pop %v119
  %v144 = vmul.f32 %v143, 0.6931472
  %v145 = vlog2.pop %v122
  %v146 = vmul.f32 %v145, 0.6931472
  %v147 = vlog2.pop %v125
  %v148 = vmul.f32 %v147, 0.6931472
  %v149 = vlog2.pop %v128
  %v150 = vmul.f32 %v149, 0.6931472
  %v151 = vlog2.pop %v131
  %v152 = vmul.f32 %v151, 0.6931472
  %v153 = vlog2.pop %v134
  %v154 = vmul.f32 %v153, 0.6931472
  %v155 = vlog2.pop %v137
  %v156 = vmul.f32 %v155, 0.6931472
  %v157 = vlog2.pop %v140
  %v158 = vmul.f32 %v157, 0.6931472
  %v159 = vadd.f32 %v142, %v62
  %v160 = vadd.f32 %v144, %v65
  %v161 = vadd.f32 %v146, %v68
  %v162 = vadd.f32 %v148, %v71
  %v163 = vadd.f32 %v150, %v74
  %v164 = vadd.f32 %v152, %v77
  %v165 = vadd.f32 %v154, %v80
  %v166 = vadd.f32 %v156, %v83
  %v167 = vadd.f32 %v158, %v86
  %v168 = vlaneseq
  %v169 = vand.u32 %v168, 127
  %170 = vset.pattern.permute.xlu0 0
  %171 = vperm.xlu0 %170, %v20
  %v172 = vpop.permute.xlu0 %171
  %173 = vset.pattern.permute.xlu0 0
  %174 = vperm.xlu0 %173, %v21
  %v175 = vpop.permute.xlu0 %174
  %176 = vset.pattern.permute.xlu0 0
  %177 = vperm.xlu0 %176, %v22
  %v178 = vpop.permute.xlu0 %177
  %179 = vset.pattern.permute.xlu0 0
  %180 = vperm.xlu0 %179, %v23
  %v181 = vpop.permute.xlu0 %180
  %182 = vset.pattern.permute.xlu0 0
  %183 = vperm.xlu0 %182, %v24
  %v184 = vpop.permute.xlu0 %183
  %185 = vset.pattern.permute.xlu0 0
  %186 = vperm.xlu0 %185, %v25
  %v187 = vpop.permute.xlu0 %186
  %188 = vset.pattern.permute.xlu0 0
  %189 = vperm.xlu0 %188, %v26
  %v190 = vpop.permute.xlu0 %189
  %191 = vset.pattern.permute.xlu0 0
  %192 = vperm.xlu0 %191, %v27
  %v193 = vpop.permute.xlu0 %192
  %194 = vset.pattern.permute.xlu0 0
  %195 = vperm.xlu0 %194, %v28
  %v196 = vpop.permute.xlu0 %195
  %vm197 = vcmp.eq.s32.totalorder %v169, %v172
  %vm198 = vcmp.eq.s32.totalorder %v169, %v175
  %vm199 = vcmp.eq.s32.totalorder %v169, %v178
  %vm200 = vcmp.eq.s32.totalorder %v169, %v181
  %vm201 = vcmp.eq.s32.totalorder %v169, %v184
  %vm202 = vcmp.eq.s32.totalorder %v169, %v187
  %vm203 = vcmp.eq.s32.totalorder %v169, %v190
  %vm204 = vcmp.eq.s32.totalorder %v169, %v193
  %vm205 = vcmp.eq.s32.totalorder %v169, %v196
  %v206 = vsel %vm197, %v11, 0.0
  %v207 = vsel %vm198, %v12, 0.0
  %v208 = vsel %vm199, %v13, 0.0
  %v209 = vsel %vm200, %v14, 0.0
  %v210 = vsel %vm201, %v15, 0.0
  %v211 = vsel %vm202, %v16, 0.0
  %v212 = vsel %vm203, %v17, 0.0
  %v213 = vsel %vm204, %v18, 0.0
  %v214 = vsel %vm205, %v19, 0.0
  %v215 = vsel %vm59, %v206, 0.0
  %216 = vadd.xlane.f32.xlu0 %v215
  %v217 = vpop.xlane.xlu0 %216
  %v218 = vsel %vm59, %v207, 0.0
  %219 = vadd.xlane.f32.xlu0 %v218
  %v220 = vpop.xlane.xlu0 %219
  %v221 = vsel %vm59, %v208, 0.0
  %222 = vadd.xlane.f32.xlu0 %v221
  %v223 = vpop.xlane.xlu0 %222
  %v224 = vsel %vm59, %v209, 0.0
  %225 = vadd.xlane.f32.xlu0 %v224
  %v226 = vpop.xlane.xlu0 %225
  %v227 = vsel %vm59, %v210, 0.0
  %228 = vadd.xlane.f32.xlu0 %v227
  %v229 = vpop.xlane.xlu0 %228
  %v230 = vsel %vm59, %v211, 0.0
  %231 = vadd.xlane.f32.xlu0 %v230
  %v232 = vpop.xlane.xlu0 %231
  %v233 = vsel %vm59, %v212, 0.0
  %234 = vadd.xlane.f32.xlu0 %v233
  %v235 = vpop.xlane.xlu0 %234
  %v236 = vsel %vm59, %v213, 0.0
  %237 = vadd.xlane.f32.xlu0 %v236
  %v238 = vpop.xlane.xlu0 %237
  %v239 = vsel %vm59, %v214, 0.0
  %240 = vadd.xlane.f32.xlu0 %v239
  %v241 = vpop.xlane.xlu0 %240
  %v242 = vsub.f32 %v159, %v217
  %v243 = vsub.f32 %v160, %v220
  %v244 = vsub.f32 %v161, %v223
  %v245 = vsub.f32 %v162, %v226
  %v246 = vsub.f32 %v163, %v229
  %v247 = vsub.f32 %v164, %v232
  %v248 = vsub.f32 %v165, %v235
  %v249 = vsub.f32 %v166, %v238
  %v250 = vsub.f32 %v167, %v241
  %v251 = vsel %vm50, %v242, 0.0
  %v252 = vsel %vm51, %v243, 0.0
  %v253 = vsel %vm52, %v244, 0.0
  %v254 = vsel %vm53, %v245, 0.0
  %v255 = vsel %vm54, %v246, 0.0
  %v256 = vsel %vm55, %v247, 0.0
  %v257 = vsel %vm56, %v248, 0.0
  %v258 = vsel %vm57, %v249, 0.0
  %v259 = vsel %vm58, %v250, 0.0
  %vm260 = vcmask 7168
  %v261 = vsel %vm260, %v251, 0.0
  %v262 = vsel %vm260, %v252, 0.0
  %v263 = vadd.f32 %v261, %v262
  %v264 = vsel %vm260, %v253, 0.0
  %v265 = vadd.f32 %v263, %v264
  %v266 = vsel %vm260, %v254, 0.0
  %v267 = vadd.f32 %v265, %v266
  %v268 = vsel %vm260, %v255, 0.0
  %v269 = vadd.f32 %v267, %v268
  %v270 = vsel %vm260, %v256, 0.0
  %v271 = vadd.f32 %v269, %v270
  %v272 = vsel %vm260, %v257, 0.0
  %v273 = vadd.f32 %v271, %v272
  %v274 = vsel %vm260, %v258, 0.0
  %v275 = vadd.f32 %v273, %v274
  %v276 = vsel %vm260, %v259, 0.0
  %v277 = vadd.f32 %v275, %v276
  %278 = vadd.xlane.f32.xlu0 %v277
  %v279 = vpop.xlane.xlu0 %278
  %v280 = vrot.slane %v279, 4
  %v281 = vadd.f32 %v279, %v280
  %v282 = vrot.slane %v281, 2
  %v283 = vadd.f32 %v281, %v282
  %v284 = vrot.slane %v283, 1
  %v285 = vadd.f32 %v283, %v284
  %s286 = vtos %v285
  %v287 = vstv %s286
  %288 = vst [vmem:[%s2] sm:$0xff] %v287
  // Predicated region
  $region10: #{cross_entropy_pallas.1} parent=0 // pred_check
    _
  $region11: #{cross_entropy_pallas.1} parent=0 // pred_check_branch
    %290 = sbr.rel (0) target = $region13
  $region12: #{cross_entropy_pallas.1} parent=0 // pred_region
    _
  $region13: #{cross_entropy_pallas.1} parent=0 // pred_fallthru
    _
  // Predicated region
  $region14: #{cross_entropy_pallas.1} parent=0 // pred_check
    _
  $region15: #{cross_entropy_pallas.1} parent=0 // pred_check_branch
    %292 = sbr.rel (0) target = $region17
  $region16: #{cross_entropy_pallas.1} parent=0 // pred_region
    _
  $region17: #{cross_entropy_pallas.1} parent=0 // pred_fallthru
    _

</llo_original>
